<compile_context>
chip_gen: v5e
topology: v5e:2x2
jax: 0.10.0
libtpu: 0.0.40
codegen_flags: <defaults>
</compile_context>

<pallas_src>
import functools

import jax
import jax.numpy as jnp
from jax.experimental import pallas as pl
from jax.experimental.pallas import tpu as pltpu

_LANES = 128
_SUBLANES = 8
# 8192 rows x 128 lanes x 4 B = 4 MiB per (f32) input per pipeline buffer;
# 2 inputs x double-buffering = 16 MiB, inside the 32 MiB vmem limit below.
_MAX_BLOCK_ROWS = 8192


def _dice_partials_kernel(p_ref, t_ref, out_ref, *, evaluation_mode: bool,
                          block_rows: int, blocks_per_split: int,
                          total_rows: int, needs_mask: bool):
    """Accumulate partial sums into the resident (32, 128) output block.

    out_ref sublane rows:  0: 7 -> sum(p*t)
                           8:15 -> sum(p)
                          16:23 -> sum(t)
                          24:31 -> sum(|t-p|)  (train mode only; zero in eval)
    """
    c = pl.program_id(0)   # TensorCore split ("parallel" axis)
    k = pl.program_id(1)   # row-block index within the split ("arbitrary")

    @pl.when(k == 0)
    def _init():
        out_ref[...] = jnp.zeros_like(out_ref)

    p = p_ref[...].astype(jnp.float32)
    t = t_ref[...].astype(jnp.float32)

    # Reduce (block_rows, 128) -> (8, 128) with pure cross-vreg VPU adds via a
    # tile-aligned reshape (no per-step XLU).  Tiny blocks whose row count is
    # not a multiple of 8 fall back to a (1, 128) sublane reduce.
    aligned = (block_rows % _SUBLANES) == 0
    r = _SUBLANES if aligned else 1

    def _reduce_rows(x):
        if aligned:
            return jnp.sum(x.reshape(-1, _SUBLANES, _LANES), axis=0)
        return jnp.sum(x, axis=0, keepdims=True)

    def _accumulate(pv, tv):
        if evaluation_mode:
            pv = jnp.round(pv)          # torch.round == round-half-to-even
        out_ref[0:r, :] += _reduce_rows(pv * tv)
        out_ref[8:8 + r, :] += _reduce_rows(pv)
        out_ref[16:16 + r, :] += _reduce_rows(tv)
        if not evaluation_mode:
            out_ref[24:24 + r, :] += _reduce_rows(jnp.abs(tv - pv))

    if not needs_mask:
        _accumulate(p, t)
    else:
        gb = c * blocks_per_split + k           # global (unclamped) block idx
        row_end = (gb + 1) * block_rows

        @pl.when(row_end <= total_rows)         # fully in-range block: no mask
        def _full():
            _accumulate(p, t)

        @pl.when(row_end > total_rows)          # overhanging / out-of-range
        def _partial():
            row0 = gb * block_rows
            local = jax.lax.broadcasted_iota(jnp.int32, (block_rows, _LANES), 0)
            valid = (row0 + local) < total_rows
            _accumulate(jnp.where(valid, p, 0.0), jnp.where(valid, t, 0.0))


def _dice_partials(preds_2d, targets_2d, evaluation_mode: bool):
    """Pallas reduction; returns (num_splits, 32, 128) f32 partial sums."""
    rows = preds_2d.shape[0]
    block_rows = min(rows, _MAX_BLOCK_ROWS)
    nb = pl.cdiv(rows, block_rows)              # total row-blocks
    num_splits = 2 if nb >= 2 else 1            # engage both v7x TensorCores
    nbc = pl.cdiv(nb, num_splits)               # row-blocks per split
    needs_mask = (rows % block_rows != 0) or (num_splits * nbc != nb)

    kernel = functools.partial(
        _dice_partials_kernel,
        evaluation_mode=evaluation_mode,
        block_rows=block_rows,
        blocks_per_split=nbc,
        total_rows=rows,
        needs_mask=needs_mask,
    )

    def in_map(c, k):
        # Clamp so the DMA never reads past the array; steps whose global
        # block index is out of range are fully masked in-kernel (contribute
        # exactly zero), so re-reading the last block there is harmless.
        return (jnp.minimum(c * nbc + k, nb - 1), 0)

    return pl.pallas_call(
        kernel,
        out_shape=jax.ShapeDtypeStruct((num_splits, 32, _LANES), jnp.float32),
        grid_spec=pltpu.PrefetchScalarGridSpec(
            num_scalar_prefetch=0,
            grid=(num_splits, nbc),
            in_specs=[
                pl.BlockSpec((block_rows, _LANES), in_map),
                pl.BlockSpec((block_rows, _LANES), in_map),
            ],
            out_specs=pl.BlockSpec((None, 32, _LANES), lambda c, k: (c, 0, 0)),
        ),
        compiler_params=pltpu.CompilerParams(
            dimension_semantics=("parallel", "arbitrary"),
            vmem_limit_bytes=32 * 1024 * 1024),
    )(preds_2d, targets_2d)


def dice_loss(preds, targets, smooth: float = 1e-6,
              evaluation_mode: bool = False):
    """JAX/Pallas equivalent of DiceLoss.forward(preds, targets)."""
    preds = jnp.asarray(preds)
    targets = jnp.asarray(targets)
    # Keep narrow dtypes (bf16 / int8 / int32) — the kernel upcasts on load,
    # so HBM only moves the original bytes.  Bools become int8 (still 1 byte)
    # so the VMEM tile layout stays well-defined.
    if preds.dtype == jnp.bool_:
        preds = preds.astype(jnp.int8)
    if targets.dtype == jnp.bool_:
        targets = targets.astype(jnp.int8)

    preds = preds.reshape(-1)
    targets = targets.reshape(-1)
    n = preds.shape[0]
    rem = n % _LANES
    m = n - rem

    inter = jnp.float32(0.0)
    sum_p = jnp.float32(0.0)
    sum_t = jnp.float32(0.0)
    sum_abs = jnp.float32(0.0)

    if rem:
        # <128-element lane tail: reduce in plain JAX (negligible) instead of
        # padding the whole array to a lane multiple.
        tp = preds[m:].astype(jnp.float32)
        tt = targets[m:].astype(jnp.float32)
        if evaluation_mode:
            tp = jnp.round(tp)
        inter = inter + jnp.sum(tp * tt)
        sum_p = sum_p + jnp.sum(tp)
        sum_t = sum_t + jnp.sum(tt)
        if not evaluation_mode:
            sum_abs = sum_abs + jnp.sum(jnp.abs(tt - tp))

    if m:
        rows = m // _LANES
        if rem:
            # TODO(synk): this prefix slice still materializes one copy when n
            # is not lane-aligned; a fully copy-free path would need manual
            # DMA from HBM (memory_space=pl.ANY).  The aligned case is free.
            p_main, t_main = preds[:m], targets[:m]
        else:
            p_main, t_main = preds, targets
        partials = _dice_partials(p_main.reshape(rows, _LANES),
                                  t_main.reshape(rows, _LANES),
                                  evaluation_mode)
        inter = inter + jnp.sum(partials[:, 0:8, :])
        sum_p = sum_p + jnp.sum(partials[:, 8:16, :])
        sum_t = sum_t + jnp.sum(partials[:, 16:24, :])
        if not evaluation_mode:
            sum_abs = sum_abs + jnp.sum(partials[:, 24:32, :])

    dice = (2.0 * inter + smooth) / (sum_p + sum_t + smooth)
    if evaluation_mode:
        return 1.0 - dice

    # NOTE: sum|t-p| is kept explicit (not replaced by sum_t+sum_p-2*inter) so
    # non-binary targets / preds outside [0,1] stay numerically exact.
    check_tar = jnp.clip(sum_t, 0.0, 1.0)
    mae = sum_abs / jnp.float32(n)
    return check_tar * (1.0 - dice) + (1.0 - check_tar) * mae


def _ref_dice(preds, targets, smooth: float = 1e-6,
              evaluation_mode: bool = False):
    """Plain-JAX reference mirroring the PyTorch module."""
    p = jnp.asarray(preds).reshape(-1).astype(jnp.float32)
    t = jnp.asarray(targets).reshape(-1).astype(jnp.float32)
    if evaluation_mode:
        p = jnp.round(p)
        inter = jnp.sum(p * t)
        dice = (2.0 * inter + smooth) / (jnp.sum(p) + jnp.sum(t) + smooth)
        return 1.0 - dice
    inter = jnp.sum(p * t)
    dice = (2.0 * inter + smooth) / (jnp.sum(p) + jnp.sum(t) + smooth)
    check_tar = jnp.clip(jnp.sum(t), 0.0, 1.0)
    return (check_tar * (1.0 - dice)
            + (1.0 - check_tar) * jnp.mean(jnp.abs(t - p)))


if __name__ == "__main__":
    key = jax.random.PRNGKey(0)
    k1, k2, k3, k4 = jax.random.split(key, 4)

    # Small NCHW segmentation-style tensors.
    preds = jax.nn.sigmoid(jax.random.normal(k1, (2, 4, 16, 16), jnp.float32))
    targets = (jax.random.uniform(k2, (2, 4, 16, 16)) > 0.5).astype(jnp.float32)

    out_train = jax.block_until_ready(dice_loss(preds, targets))
    out_eval = jax.block_until_ready(
        dice_loss(preds, targets, evaluation_mode=True))
    assert jnp.allclose(out_train, _ref_dice(preds, targets),
                        rtol=1e-5, atol=1e-6), (out_train,
                                                _ref_dice(preds, targets))
    assert jnp.allclose(out_eval, _ref_dice(preds, targets,
                                            evaluation_mode=True),
                        rtol=1e-5, atol=1e-6)

    # Mixed narrow dtypes: bf16 preds + int32 {0,1} targets (upcast in-kernel).
    preds_bf16 = preds.astype(jnp.bfloat16)
    targets_i32 = targets.astype(jnp.int32)
    out_mixed = jax.block_until_ready(dice_loss(preds_bf16, targets_i32))
    assert jnp.allclose(out_mixed, _ref_dice(preds_bf16, targets_i32),
                        rtol=1e-4, atol=1e-4)

    # Lane-unaligned element count (exercises the plain-JAX tail path).
    p_odd = jax.nn.sigmoid(jax.random.normal(k3, (3, 5, 7, 11), jnp.float32))
    t_odd = (jax.random.uniform(k4, (3, 5, 7, 11)) > 0.5).astype(jnp.float32)
    out_odd = jax.block_until_ready(dice_loss(p_odd, t_odd))
    assert jnp.allclose(out_odd, _ref_dice(p_odd, t_odd),
                        rtol=1e-5, atol=1e-6)

    print("KERNEL_OK")
</pallas_src>

<mosaic_0001>
module attributes {stable_mosaic.version = 11 : i64} {
  func.func @_dice_partials_kernel(%arg0: i32, %arg1: i32, %arg2: memref<16x128xf32, #tpu.memory_space<vmem>>, %arg3: memref<16x128xf32, #tpu.memory_space<vmem>>, %arg4: memref<1x32x128xf32, #tpu.memory_space<vmem>>) attributes {dimension_semantics = [#tpu.dimension_semantics<parallel>, #tpu.dimension_semantics<arbitrary>], iteration_bounds = array<i64: 1, 1>, scalar_prefetch = 0 : i64, scratch_operands = 0 : i64, tpu.core_type = #tpu.core_type<tc>, window_params = [{transform_indices = @transform_0, window_bounds = array<i64: 16, 128>}, {transform_indices = @transform_1, window_bounds = array<i64: 16, 128>}, {transform_indices = @transform_2, window_bounds = array<i64: 1, 32, 128>}]} {
    %c0_i32 = arith.constant 0 : i32
    %0 = arith.cmpi eq, %arg1, %c0_i32 : i32
    %1 = arith.extui %0 : i1 to i32
    %c0_i32_0 = arith.constant 0 : i32
    %2 = arith.cmpi ne, %1, %c0_i32_0 : i32
    scf.if %2 {
      %cst_28 = arith.constant 0.000000e+00 : f32
      %40 = vector.broadcast %cst_28 : f32 to vector<32x128xf32>
      %c0_29 = arith.constant 0 : index
      %c0_30 = arith.constant 0 : index
      %c0_31 = arith.constant 0 : index
      %41 = vector.load %arg4[%c0_29, %c0_30, %c0_31] : memref<1x32x128xf32, #tpu.memory_space<vmem>>, vector<1x32x128xf32>
      %42 = vector.shape_cast %41 : vector<1x32x128xf32> to vector<32x128xf32>
      %43 = vector.shape_cast %40 : vector<32x128xf32> to vector<1x32x128xf32>
      tpu.vector_store %arg4[%c0_29, %c0_30, %c0_31], %43 {strides = array<i32>} : memref<1x32x128xf32, #tpu.memory_space<vmem>>, vector<1x32x128xf32>,
    } else {
    }
    %c0 = arith.constant 0 : index
    %c0_1 = arith.constant 0 : index
    %3 = vector.load %arg2[%c0, %c0_1] : memref<16x128xf32, #tpu.memory_space<vmem>>, vector<16x128xf32>
    %c0_2 = arith.constant 0 : index
    %c0_3 = arith.constant 0 : index
    %4 = vector.load %arg3[%c0_2, %c0_3] : memref<16x128xf32, #tpu.memory_space<vmem>>, vector<16x128xf32>
    %c0_4 = arith.constant 0 : index
    %c0_5 = arith.constant 0 : index
    %c0_6 = arith.constant 0 : index
    %5 = vector.load %arg4[%c0_4, %c0_5, %c0_6] : memref<1x32x128xf32, #tpu.memory_space<vmem>>, vector<1x8x128xf32>
    %6 = vector.shape_cast %5 : vector<1x8x128xf32> to vector<8x128xf32>
    %7 = arith.mulf %3, %4 : vector<16x128xf32>
    %8 = vector.shape_cast %7 : vector<16x128xf32> to vector<2x8x128xf32>
    %cst = arith.constant dense<0.000000e+00> : vector<8x128xf32>
    %9 = vector.multi_reduction <add>, %8, %cst [0] : vector<2x8x128xf32> to vector<8x128xf32>
    %10 = arith.addf %6, %9 : vector<8x128xf32>
    %c0_7 = arith.constant 0 : index
    %c0_8 = arith.constant 0 : index
    %c0_9 = arith.constant 0 : index
    %11 = vector.load %arg4[%c0_7, %c0_8, %c0_9] : memref<1x32x128xf32, #tpu.memory_space<vmem>>, vector<1x8x128xf32>
    %12 = vector.shape_cast %11 : vector<1x8x128xf32> to vector<8x128xf32>
    %13 = vector.shape_cast %10 : vector<8x128xf32> to vector<1x8x128xf32>
    tpu.vector_store %arg4[%c0_7, %c0_8, %c0_9], %13 {strides = array<i32>} : memref<1x32x128xf32, #tpu.memory_space<vmem>>, vector<1x8x128xf32>,
    %c0_10 = arith.constant 0 : index
    %c8 = arith.constant 8 : index
    %c0_11 = arith.constant 0 : index
    %14 = vector.load %arg4[%c0_10, %c8, %c0_11] : memref<1x32x128xf32, #tpu.memory_space<vmem>>, vector<1x8x128xf32>
    %15 = vector.shape_cast %14 : vector<1x8x128xf32> to vector<8x128xf32>
    %16 = vector.shape_cast %3 : vector<16x128xf32> to vector<2x8x128xf32>
    %cst_12 = arith.constant dense<0.000000e+00> : vector<8x128xf32>
    %17 = vector.multi_reduction <add>, %16, %cst_12 [0] : vector<2x8x128xf32> to vector<8x128xf32>
    %18 = arith.addf %15, %17 : vector<8x128xf32>
    %c0_13 = arith.constant 0 : index
    %c8_14 = arith.constant 8 : index
    %c0_15 = arith.constant 0 : index
    %19 = vector.load %arg4[%c0_13, %c8_14, %c0_15] : memref<1x32x128xf32, #tpu.memory_space<vmem>>, vector<1x8x128xf32>
    %20 = vector.shape_cast %19 : vector<1x8x128xf32> to vector<8x128xf32>
    %21 = vector.shape_cast %18 : vector<8x128xf32> to vector<1x8x128xf32>
    tpu.vector_store %arg4[%c0_13, %c8_14, %c0_15], %21 {strides = array<i32>} : memref<1x32x128xf32, #tpu.memory_space<vmem>>, vector<1x8x128xf32>,
    %c0_16 = arith.constant 0 : index
    %c16 = arith.constant 16 : index
    %c0_17 = arith.constant 0 : index
    %22 = vector.load %arg4[%c0_16, %c16, %c0_17] : memref<1x32x128xf32, #tpu.memory_space<vmem>>, vector<1x8x128xf32>
    %23 = vector.shape_cast %22 : vector<1x8x128xf32> to vector<8x128xf32>
    %24 = vector.shape_cast %4 : vector<16x128xf32> to vector<2x8x128xf32>
    %cst_18 = arith.constant dense<0.000000e+00> : vector<8x128xf32>
    %25 = vector.multi_reduction <add>, %24, %cst_18 [0] : vector<2x8x128xf32> to vector<8x128xf32>
    %26 = arith.addf %23, %25 : vector<8x128xf32>
    %c0_19 = arith.constant 0 : index
    %c16_20 = arith.constant 16 : index
    %c0_21 = arith.constant 0 : index
    %27 = vector.load %arg4[%c0_19, %c16_20, %c0_21] : memref<1x32x128xf32, #tpu.memory_space<vmem>>, vector<1x8x128xf32>
    %28 = vector.shape_cast %27 : vector<1x8x128xf32> to vector<8x128xf32>
    %29 = vector.shape_cast %26 : vector<8x128xf32> to vector<1x8x128xf32>
    tpu.vector_store %arg4[%c0_19, %c16_20, %c0_21], %29 {strides = array<i32>} : memref<1x32x128xf32, #tpu.memory_space<vmem>>, vector<1x8x128xf32>,
    %c0_22 = arith.constant 0 : index
    %c24 = arith.constant 24 : index
    %c0_23 = arith.constant 0 : index
    %30 = vector.load %arg4[%c0_22, %c24, %c0_23] : memref<1x32x128xf32, #tpu.memory_space<vmem>>, vector<1x8x128xf32>
    %31 = vector.shape_cast %30 : vector<1x8x128xf32> to vector<8x128xf32>
    %32 = arith.subf %4, %3 : vector<16x128xf32>
    %33 = math.absf %32 : vector<16x128xf32>
    %34 = vector.shape_cast %33 : vector<16x128xf32> to vector<2x8x128xf32>
    %cst_24 = arith.constant dense<0.000000e+00> : vector<8x128xf32>
    %35 = vector.multi_reduction <add>, %34, %cst_24 [0] : vector<2x8x128xf32> to vector<8x128xf32>
    %36 = arith.addf %31, %35 : vector<8x128xf32>
    %c0_25 = arith.constant 0 : index
    %c24_26 = arith.constant 24 : index
    %c0_27 = arith.constant 0 : index
    %37 = vector.load %arg4[%c0_25, %c24_26, %c0_27] : memref<1x32x128xf32, #tpu.memory_space<vmem>>, vector<1x8x128xf32>
    %38 = vector.shape_cast %37 : vector<1x8x128xf32> to vector<8x128xf32>
    %39 = vector.shape_cast %36 : vector<8x128xf32> to vector<1x8x128xf32>
    tpu.vector_store %arg4[%c0_25, %c24_26, %c0_27], %39 {strides = array<i32>} : memref<1x32x128xf32, #tpu.memory_space<vmem>>, vector<1x8x128xf32>,
    return
  }
  func.func @transform_0(%arg0: i32, %arg1: i32) -> (i32, i32) {
    %c1_i32 = arith.constant 1 : i32
    %0 = arith.muli %arg0, %c1_i32 : i32
    %1 = arith.addi %0, %arg1 : i32
    %c0_i32 = arith.constant 0 : i32
    %2 = arith.minsi %1, %c0_i32 : i32
    %c0_i32_0 = arith.constant 0 : i32
    %c0_i32_1 = arith.constant 0 : i32
    return %2, %c0_i32_0 : i32, i32
  }
  func.func @transform_1(%arg0: i32, %arg1: i32) -> (i32, i32) {
    %c1_i32 = arith.constant 1 : i32
    %0 = arith.muli %arg0, %c1_i32 : i32
    %1 = arith.addi %0, %arg1 : i32
    %c0_i32 = arith.constant 0 : i32
    %2 = arith.minsi %1, %c0_i32 : i32
    %c0_i32_0 = arith.constant 0 : i32
    %c0_i32_1 = arith.constant 0 : i32
    return %2, %c0_i32_0 : i32, i32
  }
  func.func @transform_2(%arg0: i32, %arg1: i32) -> (i32, i32, i32) {
    %c0_i32 = arith.constant 0 : i32
    %c0_i32_0 = arith.constant 0 : i32
    %c0_i32_1 = arith.constant 0 : i32
    return %arg0, %c0_i32, %c0_i32_0 : i32, i32, i32
  }
}

</mosaic_0001>

<llo_original>
// kernel: tpu_custom_call.1
$region0: #{tpu_custom_call.1}
  #allocation0 [shape = 'u32[]', space=smem, size = 0x4, offset = 0x4, fixed_abs, tag = 'smem constant byte address 0x4 - core index']
  #allocation1 [shape = 'u32[72,128]{1,0:T(1,128)}', space=vmem, size = 0x9000, scoped, tag = 'internal scratch']
  %s0 = inlined_call_operand.hbm [shape: f32[16,128], index: 0, kind: input, shape index: {}]
  %s1 = inlined_call_operand.hbm [shape: f32[16,128], index: 1, kind: input, shape index: {}]
  %s2 = inlined_call_operand.hbm [shape: f32[1,32,128], index: 2, kind: output, shape index: {}]
  %s3 = sld [smem:[#allocation0]]
  $region30: #{tpu_custom_call.1} parent=0
    _
  %s5 = ssub.s32 1, %s3
  %s6 = scalar_select 0, %s5, %s3
  $region1: #{tpu_custom_call.1} parent=0
    #allocation2 [shape = 'u8[8192]{0}', space=vmem, size = 0x2000, scoped, tag = 'input window, operand 0, single buffered']
    #allocation3 [shape = 's32[1]{0}', space=sflag, size = 0x4, scoped, tag = 'scoped memory for tpu_custom_call.1']
    #allocation4 [shape = 's32[1]{0}', space=sflag, size = 0x4, scoped, tag = 'scoped memory for tpu_custom_call.1']
    #allocation5 [shape = 'u8[8192]{0}', space=vmem, size = 0x2000, scoped, tag = 'input window, operand 1, single buffered']
    #allocation6 [shape = 's32[1]{0}', space=sflag, size = 0x4, scoped, tag = 'scoped memory for tpu_custom_call.1']
    #allocation7 [shape = 'u8[16384]{0}', space=vmem, size = 0x4000, scoped, tag = 'output window, operand 0, single buffered']
    %7 = vsyncpa [#allocation3], 0
    %8 = vsyncpa [#allocation6], 0
    %9 = vsyncpa [#allocation4], 0
    // Predicated region
    $region2: #{tpu_custom_call.1} parent=1 // pred_check
      _
    $region3: #{tpu_custom_call.1} parent=1 // pred_check_branch
      %11 = sbr.rel (0) target = $region5
    $region4: #{tpu_custom_call.1} parent=1 // pred_region
      %s12 = sadd.s32 0, 0
      %p13 = scmp.lt.s32.totalorder %s12, 0
      %s14 = scalar_select %p13, %s12, 0
      %s15 = smul.u32 2, %s14
      %17 = vsyncadd [#allocation3], 0
      %s18 = smul.addr %s15, 8
      %s19 = scalar_lea.hbm %s0, %s18
      %s20 = sshll.u32 %s19, 4
      %s21 = int_to_ptr.hbm [resolvable:$true] %s20
      %s22 = sshll.u32 [#allocation2], 4
      %s23 = int_to_ptr.vmem [resolvable:$true] %s22
      %28 = dma.hbm_to_vmem [thread:$0]  %s21, 256, %s23, [#allocation3], 128, 128, 8
    $region5: #{tpu_custom_call.1} parent=1 // pred_fallthru
      _
    // Predicated region
    $region6: #{tpu_custom_call.1} parent=1 // pred_check
      _
    $region7: #{tpu_custom_call.1} parent=1 // pred_check_branch
      %30 = sbr.rel (0) target = $region9
    $region8: #{tpu_custom_call.1} parent=1 // pred_region
      %s31 = sadd.s32 0, 0
      %p32 = scmp.lt.s32.totalorder %s31, 0
      %s33 = scalar_select %p32, %s31, 0
      %s34 = smul.u32 2, %s33
      %36 = vsyncadd [#allocation6], 0
      %s37 = smul.addr %s34, 8
      %s38 = scalar_lea.hbm %s1, %s37
      %s39 = sshll.u32 %s38, 4
      %s40 = int_to_ptr.hbm [resolvable:$true] %s39
      %s41 = sshll.u32 [#allocation5], 4
      %s42 = int_to_ptr.vmem [resolvable:$true] %s41
      %47 = dma.hbm_to_vmem [thread:$0]  %s40, 256, %s42, [#allocation6], 128, 128, 8
    $region9: #{tpu_custom_call.1} parent=1 // pred_fallthru
      _
    // Predicated region
    $region10: #{tpu_custom_call.1} parent=1 // pred_check
      _
    $region11: #{tpu_custom_call.1} parent=1 // pred_check_branch
      %49 = sbr.rel (0) target = $region13
    $region12: #{tpu_custom_call.1} parent=1 // pred_region
      %51 = dma.done [#allocation3], 256
    $region13: #{tpu_custom_call.1} parent=1 // pred_fallthru
      _
    // Predicated region
    $region14: #{tpu_custom_call.1} parent=1 // pred_check
      _
    $region15: #{tpu_custom_call.1} parent=1 // pred_check_branch
      %53 = sbr.rel (0) target = $region17
    $region16: #{tpu_custom_call.1} parent=1 // pred_region
      %55 = dma.done [#allocation6], 256
    $region17: #{tpu_custom_call.1} parent=1 // pred_fallthru
      _
    %s56 = sadd.s32 0, 0
    %p57 = scmp.lt.s32.totalorder %s56, 0
    %s58 = scalar_select %p57, %s56, 0
    %s59 = smul.u32 2, %s58
    %s60 = sadd.s32 0, 0
    %p61 = scmp.lt.s32.totalorder %s60, 0
    %s62 = scalar_select %p61, %s60, 0
    %s63 = smul.u32 2, %s62
    %p64 = scmp.eq.s32.totalorder 0, 0
    // Predicated region
    $region18: #{tpu_custom_call.1} parent=1 // pred_check
      %p65 = pneg %p64
    $region19: #{tpu_custom_call.1} parent=1 // pred_check_branch
      %67 = sbr.rel (%p65) target = $region21
    $region20: #{tpu_custom_call.1} parent=1 // pred_region
      %68 = vst [vmem:[#allocation7] sm:$0xff] 0.0
      %69 = vst [vmem:[#allocation7 + $0x8] sm:$0xff] 0.0
      %70 = vst [vmem:[#allocation7 + $0x10] sm:$0xff] 0.0
      %71 = vst [vmem:[#allocation7 + $0x18] sm:$0xff] 0.0
    $region21: #{tpu_custom_call.1} parent=1 // pred_fallthru
      _
    %v72 = vld [vmem:[#allocation2] sm:$0xff]
    %v73 = vld [vmem:[#allocation2 + $0x8] sm:$0xff]
    %v74 = vld [vmem:[#allocation5] sm:$0xff]
    %v75 = vld [vmem:[#allocation5 + $0x8] sm:$0xff]
    %v76 = vld [vmem:[#allocation7] sm:$0xff]
    %v77 = vmul.f32 %v72, %v74
    %v78 = vmul.f32 %v73, %v75
    %v79 = vadd.f32 %v77, %v78
    %v80 = vadd.f32 %v76, %v79
    %81 = vst [vmem:[#allocation7] sm:$0xff] %v80
    %v82 = vld [vmem:[#allocation7 + $0x8] sm:$0xff]
    %v83 = vadd.f32 %v72, %v73
    %v84 = vadd.f32 %v82, %v83
    %85 = vst [vmem:[#allocation7 + $0x8] sm:$0xff] %v84
    %v86 = vld [vmem:[#allocation7 + $0x10] sm:$0xff]
    %v87 = vadd.f32 %v74, %v75
    %v88 = vadd.f32 %v86, %v87
    %89 = vst [vmem:[#allocation7 + $0x10] sm:$0xff] %v88
    %v90 = vld [vmem:[#allocation7 + $0x18] sm:$0xff]
    %v91 = vsub.f32 %v74, %v72
    %v92 = vsub.f32 %v75, %v73
    %v93 = vand.u32 2147483647, %v91
    %v94 = vand.u32 2147483647, %v92
    %v95 = vadd.f32 %v93, %v94
    %v96 = vadd.f32 %v90, %v95
    %97 = vst [vmem:[#allocation7 + $0x18] sm:$0xff] %v96
    // Predicated region
    $region22: #{tpu_custom_call.1} parent=1 // pred_check
      _
    $region23: #{tpu_custom_call.1} parent=1 // pred_check_branch
      %99 = sbr.rel (0) target = $region25
    $region24: #{tpu_custom_call.1} parent=1 // pred_region
      %101 = vsyncadd [#allocation4], 0
      %s102 = sshll.u32 [#allocation7], 4
      %s103 = int_to_ptr.vmem [resolvable:$true] %s102
      %s104 = sshll.u32 %s2, 4
      %s105 = int_to_ptr.hbm [resolvable:$true] %s104
      %110 = dma.vmem_to_hbm [thread:$0]  %s103, 512, %s105, [#allocation4], 128, 128, 8
    $region25: #{tpu_custom_call.1} parent=1 // pred_fallthru
      _
    // Predicated region
    $region26: #{tpu_custom_call.1} parent=1 // pred_check
      _
    $region27: #{tpu_custom_call.1} parent=1 // pred_check_branch
      %112 = sbr.rel (0) target = $region29
    $region28: #{tpu_custom_call.1} parent=1 // pred_region
      %114 = dma.done [#allocation4], 512
    $region29: #{tpu_custom_call.1} parent=1 // pred_fallthru
      _
    %115 = vsyncpa [#allocation3], 1
    %116 = vsyncpa [#allocation6], 1
    %117 = vsyncpa [#allocation4], 1

</llo_original>
